<compile_context>
chip_gen: v5e
topology: v5e:2x2
jax: 0.10.0
libtpu: 0.0.40
codegen_flags: <defaults>
</compile_context>

<pallas_src>
import functools

import jax
import jax.numpy as jnp
from jax.experimental import pallas as pl
from jax.experimental.pallas import tpu as pltpu


def _round_up(n, m):
    return (n + m - 1) // m * m


# ----------------------------------------------------------------------------
# Kernel
# ----------------------------------------------------------------------------
def _fused_view_kernel(x_ref, w1_ref, t1_ref, w2_ref, t2_ref, o_ref):
    """One (view, batch-tile) step: out = relu(x @ W1' + t1) @ W2' + t2.

    W1' = W1 * bn1_scale (folded per-column), W2' = W2 * bn2_scale.
    x / W are bf16; accumulation and epilogue are f32; store is bf16.
    """
    h = jnp.dot(x_ref[...], w1_ref[...], preferred_element_type=jnp.float32)
    h = jnp.maximum(h + t1_ref[...], 0.0)            # folded-BN shift + ReLU
    # Dropout(0.3): identity in eval mode.
    o = jnp.dot(h.astype(w2_ref.dtype), w2_ref[...],
                preferred_element_type=jnp.float32)
    o_ref[...] = (o + t2_ref[...]).astype(o_ref.dtype)


def _fused_multi_view_call(x_stk, w1_stk, t1_stk, w2_stk, t2_stk, tb,
                           vmem_limit_bytes):
    """Single pallas_call over all views and batch tiles."""
    V, B_pad, D_pad = x_stk.shape
    H_pad = w1_stk.shape[2]
    O_pad = w2_stk.shape[2]
    grid_b = B_pad // tb

    # Single-buffer the per-view weights only when they are big enough to
    # matter for VMEM (they change once per view, so at most one exposed DMA).
    w_kwargs = {}
    if (D_pad * H_pad + H_pad * O_pad) * 2 > (8 << 20):
        w_kwargs["pipeline_mode"] = pl.Buffered(1)

    flops = 2 * V * B_pad * (D_pad * H_pad + H_pad * O_pad)
    bytes_accessed = (
        (x_stk.size + w1_stk.size + w2_stk.size) * 2      # bf16 reads
        + (t1_stk.size + t2_stk.size) * 4                 # f32 shifts
        + V * B_pad * O_pad * 2)                          # bf16 writeback

    return pl.pallas_call(
        _fused_view_kernel,
        out_shape=jax.ShapeDtypeStruct((V, B_pad, O_pad), jnp.bfloat16),
        grid_spec=pltpu.PrefetchScalarGridSpec(
            num_scalar_prefetch=0,
            grid=(V, grid_b),
            in_specs=[
                # x: per-(view, batch-tile) block; feature dim is the FULL
                # array dim (no 128 padding needed for inputs).
                pl.BlockSpec((None, tb, D_pad), lambda v, b: (v, b, 0)),
                # weights / shifts: per-view, constant across batch tiles.
                pl.BlockSpec((None, D_pad, H_pad), lambda v, b: (v, 0, 0),
                             **w_kwargs),
                pl.BlockSpec((None, 1, H_pad), lambda v, b: (v, 0, 0)),
                pl.BlockSpec((None, H_pad, O_pad), lambda v, b: (v, 0, 0),
                             **w_kwargs),
                pl.BlockSpec((None, 1, O_pad), lambda v, b: (v, 0, 0)),
            ],
            out_specs=pl.BlockSpec((None, tb, O_pad), lambda v, b: (v, b, 0)),
        ),
        compiler_params=pltpu.CompilerParams(
            dimension_semantics=("parallel", "parallel"),
            vmem_limit_bytes=vmem_limit_bytes),
        cost_estimate=pl.CostEstimate(flops=int(flops), transcendentals=0,
                                      bytes_accessed=int(bytes_accessed)),
    )(x_stk, w1_stk, t1_stk, w2_stk, t2_stk)


# ----------------------------------------------------------------------------
# Parameter handling (done ONCE, outside the per-call path)
# ----------------------------------------------------------------------------
def _fold_bn_into_linear(w, b, gamma, beta, mean, var, eps=1e-5):
    """Fold eval-mode BatchNorm1d into the preceding Linear.

    y = gamma * ((x @ w + b) - mean) / sqrt(var + eps) + beta
      = x @ (w * scale) + shift
    (w stored transposed [D_in, D_out]; scale broadcasts over columns.)
    """
    scale = gamma / jnp.sqrt(var + eps)
    w_folded = w * scale[None, :]
    shift = (b - mean) * scale + beta
    return w_folded, shift


def init_multi_view_params(key, input_dims, hidden_dims, output_dims):
    """Deterministic parameter init mimicking the PyTorch module's shapes."""
    params = []
    for D, H, O in zip(input_dims, hidden_dims, output_dims):
        keys = jax.random.split(key, 13)
        key, k = keys[0], keys[1:]
        params.append(dict(
            # Linear1 (weight stored transposed [D, H] vs PyTorch [H, D]).
            w1=jax.random.normal(k[0], (D, H), jnp.float32) * 0.1,
            b1=jax.random.normal(k[1], (H,), jnp.float32) * 0.1,
            # BatchNorm1d(H): gamma/beta + running stats.
            g1=1.0 + 0.1 * jax.random.normal(k[2], (H,), jnp.float32),
            be1=0.1 * jax.random.normal(k[3], (H,), jnp.float32),
            rm1=0.05 * jax.random.normal(k[4], (H,), jnp.float32),
            rv1=1.0 + 0.1 * jnp.abs(jax.random.normal(k[5], (H,), jnp.float32)),
            # Linear2.
            w2=jax.random.normal(k[6], (H, O), jnp.float32) * 0.1,
            b2=jax.random.normal(k[7], (O,), jnp.float32) * 0.1,
            # BatchNorm1d(O).
            g2=1.0 + 0.1 * jax.random.normal(k[8], (O,), jnp.float32),
            be2=0.1 * jax.random.normal(k[9], (O,), jnp.float32),
            rm2=0.05 * jax.random.normal(k[10], (O,), jnp.float32),
            rv2=1.0 + 0.1 * jnp.abs(jax.random.normal(k[11], (O,), jnp.float32)),
        ))
    return params


def prepare_multi_view_params(params):
    """Fold BN, pad and stack per-view weights ONCE; reuse across calls."""
    V = len(params)
    in_dims = tuple(int(p["w1"].shape[0]) for p in params)
    hid_dims = tuple(int(p["w1"].shape[1]) for p in params)
    out_dims = tuple(int(p["w2"].shape[1]) for p in params)

    # Inputs / W1 rows: only sublane-rounded (block == full dim is legal).
    D_pad = _round_up(max(in_dims), 16)
    # Hidden & output lane dims stay 128-aligned (lane-dense matmul + stores).
    H_pad = _round_up(max(hid_dims), 128)
    O_pad = _round_up(max(out_dims), 128)

    w1_stk = jnp.zeros((V, D_pad, H_pad), jnp.bfloat16)
    t1_stk = jnp.zeros((V, 1, H_pad), jnp.float32)
    w2_stk = jnp.zeros((V, H_pad, O_pad), jnp.bfloat16)
    t2_stk = jnp.zeros((V, 1, O_pad), jnp.float32)

    for v, p in enumerate(params):
        D, H, O = in_dims[v], hid_dims[v], out_dims[v]
        w1f, t1 = _fold_bn_into_linear(p["w1"], p["b1"], p["g1"], p["be1"],
                                       p["rm1"], p["rv1"])
        w2f, t2 = _fold_bn_into_linear(p["w2"], p["b2"], p["g2"], p["be2"],
                                       p["rm2"], p["rv2"])
        w1_stk = w1_stk.at[v, :D, :H].set(w1f.astype(jnp.bfloat16))
        t1_stk = t1_stk.at[v, 0, :H].set(t1)
        w2_stk = w2_stk.at[v, :H, :O].set(w2f.astype(jnp.bfloat16))
        t2_stk = t2_stk.at[v, 0, :O].set(t2)

    return dict(w1=w1_stk, t1=t1_stk, w2=w2_stk, t2=t2_stk,
                in_dims=in_dims, hid_dims=hid_dims, out_dims=out_dims)


# ----------------------------------------------------------------------------
# Forward (jitted; x pad/cast fuses into a single HLO around the kernel)
# ----------------------------------------------------------------------------
def _vmem_budget_bytes(tb, D_pad, H_pad, O_pad):
    b = 2 * (tb * D_pad + tb * O_pad) * 2          # double-buffered x / out (bf16)
    b += 2 * (D_pad * H_pad + H_pad * O_pad) * 2   # double-buffered weights (bf16)
    b += 2 * (H_pad + O_pad) * 4                   # shifts (f32)
    b += tb * H_pad * (4 + 2) + tb * O_pad * 4     # live h (f32 + bf16) + acc
    return b


@functools.partial(jax.jit,
                   static_argnames=("in_dims", "out_dims", "batch_tile",
                                    "use_pallas"))
def _forward_impl(xs, w1_stk, t1_stk, w2_stk, t2_stk, *,
                  in_dims, out_dims, batch_tile, use_pallas):
    V = len(xs)
    B = xs[0].shape[0]
    D_pad = w1_stk.shape[1]
    H_pad = w1_stk.shape[2]
    O_pad = w2_stk.shape[2]

    # Batch tile: generation-tuned default, clamped to the batch and to a
    # conservative VMEM budget (v7x: 64 MiB physical; v5e: 16 MiB scoped dflt).
    tb = min(_round_up(batch_tile, 16), _round_up(B, 16))
    while tb > 16 and _vmem_budget_bytes(tb, D_pad, H_pad, O_pad) > (40 << 20):
        tb = max(16, _round_up(tb // 2, 16))
    B_pad = _round_up(B, tb)
    vmem_limit = int(min(max(2 * _vmem_budget_bytes(tb, D_pad, H_pad, O_pad),
                             32 << 20), 64 << 20))

    x_stk = jnp.stack([
        jnp.pad(x.astype(jnp.bfloat16),
                ((0, B_pad - B), (0, D_pad - x.shape[1])))
        for x in xs])

    if use_pallas:
        out = _fused_multi_view_call(x_stk, w1_stk, t1_stk, w2_stk, t2_stk,
                                     tb, vmem_limit)
    else:
        # Tiny-problem fast path: plain XLA dots on the folded weights.
        outs = []
        for v in range(V):
            h = jnp.dot(x_stk[v], w1_stk[v],
                        preferred_element_type=jnp.float32) + t1_stk[v]
            h = jnp.maximum(h, 0.0)
            o = jnp.dot(h.astype(jnp.bfloat16), w2_stk[v],
                        preferred_element_type=jnp.float32) + t2_stk[v]
            outs.append(o.astype(jnp.bfloat16))
        out = jnp.stack(outs)

    return tuple(out[v, :B, :out_dims[v]] for v in range(V))


def _default_batch_tile():
    try:
        kind = jax.devices()[0].device_kind.lower()
    except Exception:
        return 256
    if "v5 lite" in kind or "v5e" in kind or "v5lite" in kind:
        return 128
    if "v6" in kind or "trillium" in kind:
        return 512
    return 256


def multi_view_backbone_forward(xs, prepared, *, batch_tile=None,
                                use_pallas=None):
    """Eval-mode forward: list of per-view [B, D_i] -> list of per-view [B, O_i]."""
    in_dims = prepared["in_dims"]
    hid_dims = prepared["hid_dims"]
    out_dims = prepared["out_dims"]
    assert len(xs) == len(in_dims)
    if batch_tile is None:
        batch_tile = _default_batch_tile()
    if use_pallas is None:
        B = xs[0].shape[0]
        macs = sum(B * (d * h + h * o)
                   for d, h, o in zip(in_dims, hid_dims, out_dims))
        use_pallas = macs >= (1 << 20)   # skip Pallas for trivial problems
    outs = _forward_impl(tuple(xs), prepared["w1"], prepared["t1"],
                         prepared["w2"], prepared["t2"],
                         in_dims=in_dims, out_dims=out_dims,
                         batch_tile=int(batch_tile),
                         use_pallas=bool(use_pallas))
    return list(outs)


# ----------------------------------------------------------------------------
# Pure-JAX reference (same bf16 rounding of weights/activations, f32 math)
# ----------------------------------------------------------------------------
def _reference_forward(xs, params):
    outs = []
    for x, p in zip(xs, params):
        w1f, t1 = _fold_bn_into_linear(p["w1"], p["b1"], p["g1"], p["be1"],
                                       p["rm1"], p["rv1"])
        w2f, t2 = _fold_bn_into_linear(p["w2"], p["b2"], p["g2"], p["be2"],
                                       p["rm2"], p["rv2"])
        xb = x.astype(jnp.bfloat16).astype(jnp.float32)
        w1b = w1f.astype(jnp.bfloat16).astype(jnp.float32)
        w2b = w2f.astype(jnp.bfloat16).astype(jnp.float32)
        h = jnp.maximum(xb @ w1b + t1, 0.0)
        hb = h.astype(jnp.bfloat16).astype(jnp.float32)
        outs.append(hb @ w2b + t2)
    return outs


if __name__ == "__main__":
    key = jax.random.PRNGKey(0)

    batch = 8
    input_dims = (16, 32)
    hidden_dims = (32, 64)
    output_dims = (24, 48)

    kp, kx0, kx1 = jax.random.split(key, 3)
    params = init_multi_view_params(kp, input_dims, hidden_dims, output_dims)
    prepared = prepare_multi_view_params(params)   # folded + padded ONCE
    xs = [
        jax.random.normal(kx0, (batch, input_dims[0]), jnp.float32),
        jax.random.normal(kx1, (batch, input_dims[1]), jnp.float32),
    ]

    # Force the Pallas path so the kernel is exercised even at demo sizes.
    outs = multi_view_backbone_forward(xs, prepared, use_pallas=True)
    outs = [jax.block_until_ready(o) for o in outs]

    refs = _reference_forward(xs, params)
    for o, r, odim in zip(outs, refs, output_dims):
        assert o.shape == (batch, odim), o.shape
        of = o.astype(jnp.float32)
        err = float(jnp.max(jnp.abs(of - r)))
        # bf16 output store -> allow bf16-level tolerance.
        assert jnp.allclose(of, r, atol=2e-2, rtol=2e-2), err

    print("KERNEL_OK")
</pallas_src>

<mosaic_0001>
module attributes {stable_mosaic.version = 11 : i64} {
  func.func @_fused_view_kernel(%arg0: i32, %arg1: i32, %arg2: memref<1x16x32xbf16, #tpu.memory_space<vmem>>, %arg3: memref<1x32x128xbf16, #tpu.memory_space<vmem>>, %arg4: memref<1x1x128xf32, #tpu.memory_space<vmem>>, %arg5: memref<1x128x128xbf16, #tpu.memory_space<vmem>>, %arg6: memref<1x1x128xf32, #tpu.memory_space<vmem>>, %arg7: memref<1x16x128xbf16, #tpu.memory_space<vmem>>) attributes {dimension_semantics = [#tpu.dimension_semantics<parallel>, #tpu.dimension_semantics<parallel>], iteration_bounds = array<i64: 2, 1>, scalar_prefetch = 0 : i64, scratch_operands = 0 : i64, tpu.core_type = #tpu.core_type<tc>, window_params = [{transform_indices = @transform_0, window_bounds = array<i64: 1, 16, 32>}, {transform_indices = @transform_1, window_bounds = array<i64: 1, 32, 128>}, {transform_indices = @transform_2, window_bounds = array<i64: 1, 1, 128>}, {transform_indices = @transform_3, window_bounds = array<i64: 1, 128, 128>}, {transform_indices = @transform_4, window_bounds = array<i64: 1, 1, 128>}, {transform_indices = @transform_5, window_bounds = array<i64: 1, 16, 128>}]} {
    %c0 = arith.constant 0 : index
    %c0_0 = arith.constant 0 : index
    %c0_1 = arith.constant 0 : index
    %0 = vector.load %arg2[%c0, %c0_0, %c0_1] : memref<1x16x32xbf16, #tpu.memory_space<vmem>>, vector<1x16x32xbf16>
    %1 = vector.shape_cast %0 : vector<1x16x32xbf16> to vector<16x32xbf16>
    %c0_2 = arith.constant 0 : index
    %c0_3 = arith.constant 0 : index
    %c0_4 = arith.constant 0 : index
    %2 = vector.load %arg3[%c0_2, %c0_3, %c0_4] : memref<1x32x128xbf16, #tpu.memory_space<vmem>>, vector<1x32x128xbf16>
    %3 = vector.shape_cast %2 : vector<1x32x128xbf16> to vector<32x128xbf16>
    %cst = arith.constant dense<0.000000e+00> : vector<16x128xf32>
    %4 = tpu.matmul %1, %3, %cst {dimension_numbers = #tpu.dot_dimension_numbers<[1], [0], [0], [1], [0, 0, 1, 1], [], []>} : vector<16x32xbf16>, vector<32x128xbf16>, vector<16x128xf32> -> vector<16x128xf32>
    %c0_5 = arith.constant 0 : index
    %c0_6 = arith.constant 0 : index
    %c0_7 = arith.constant 0 : index
    %5 = vector.load %arg4[%c0_5, %c0_6, %c0_7] : memref<1x1x128xf32, #tpu.memory_space<vmem>>, vector<1x1x128xf32>
    %6 = vector.shape_cast %5 : vector<1x1x128xf32> to vector<1x128xf32>
    %7 = vector.broadcast %6 : vector<1x128xf32> to vector<16x128xf32>
    %8 = arith.addf %4, %7 : vector<16x128xf32>
    %cst_8 = arith.constant 0.000000e+00 : f32
    %9 = vector.broadcast %cst_8 : f32 to vector<16x128xf32>
    %10 = arith.maximumf %8, %9 : vector<16x128xf32>
    %11 = arith.truncf %10 : vector<16x128xf32> to vector<16x128xbf16>
    %c0_9 = arith.constant 0 : index
    %c0_10 = arith.constant 0 : index
    %c0_11 = arith.constant 0 : index
    %12 = vector.load %arg5[%c0_9, %c0_10, %c0_11] : memref<1x128x128xbf16, #tpu.memory_space<vmem>>, vector<1x128x128xbf16>
    %13 = vector.shape_cast %12 : vector<1x128x128xbf16> to vector<128x128xbf16>
    %cst_12 = arith.constant dense<0.000000e+00> : vector<16x128xf32>
    %14 = tpu.matmul %11, %13, %cst_12 {dimension_numbers = #tpu.dot_dimension_numbers<[1], [0], [0], [1], [0, 0, 1, 1], [], []>} : vector<16x128xbf16>, vector<128x128xbf16>, vector<16x128xf32> -> vector<16x128xf32>
    %c0_13 = arith.constant 0 : index
    %c0_14 = arith.constant 0 : index
    %c0_15 = arith.constant 0 : index
    %15 = vector.load %arg6[%c0_13, %c0_14, %c0_15] : memref<1x1x128xf32, #tpu.memory_space<vmem>>, vector<1x1x128xf32>
    %16 = vector.shape_cast %15 : vector<1x1x128xf32> to vector<1x128xf32>
    %17 = vector.broadcast %16 : vector<1x128xf32> to vector<16x128xf32>
    %18 = arith.addf %14, %17 : vector<16x128xf32>
    %19 = arith.truncf %18 : vector<16x128xf32> to vector<16x128xbf16>
    %c0_16 = arith.constant 0 : index
    %c0_17 = arith.constant 0 : index
    %c0_18 = arith.constant 0 : index
    %20 = vector.load %arg7[%c0_16, %c0_17, %c0_18] : memref<1x16x128xbf16, #tpu.memory_space<vmem>>, vector<1x16x128xbf16>
    %21 = vector.shape_cast %20 : vector<1x16x128xbf16> to vector<16x128xbf16>
    %22 = vector.shape_cast %19 : vector<16x128xbf16> to vector<1x16x128xbf16>
    tpu.vector_store %arg7[%c0_16, %c0_17, %c0_18], %22 {strides = array<i32>} : memref<1x16x128xbf16, #tpu.memory_space<vmem>>, vector<1x16x128xbf16>,
    return
  }
  func.func @transform_0(%arg0: i32, %arg1: i32) -> (i32, i32, i32) {
    %c0_i32 = arith.constant 0 : i32
    %c0_i32_0 = arith.constant 0 : i32
    return %arg0, %arg1, %c0_i32 : i32, i32, i32
  }
  func.func @transform_1(%arg0: i32, %arg1: i32) -> (i32, i32, i32) {
    %c0_i32 = arith.constant 0 : i32
    %c0_i32_0 = arith.constant 0 : i32
    %c0_i32_1 = arith.constant 0 : i32
    return %arg0, %c0_i32, %c0_i32_0 : i32, i32, i32
  }
  func.func @transform_2(%arg0: i32, %arg1: i32) -> (i32, i32, i32) {
    %c0_i32 = arith.constant 0 : i32
    %c0_i32_0 = arith.constant 0 : i32
    %c0_i32_1 = arith.constant 0 : i32
    return %arg0, %c0_i32, %c0_i32_0 : i32, i32, i32
  }
  func.func @transform_3(%arg0: i32, %arg1: i32) -> (i32, i32, i32) {
    %c0_i32 = arith.constant 0 : i32
    %c0_i32_0 = arith.constant 0 : i32
    %c0_i32_1 = arith.constant 0 : i32
    return %arg0, %c0_i32, %c0_i32_0 : i32, i32, i32
  }
  func.func @transform_4(%arg0: i32, %arg1: i32) -> (i32, i32, i32) {
    %c0_i32 = arith.constant 0 : i32
    %c0_i32_0 = arith.constant 0 : i32
    %c0_i32_1 = arith.constant 0 : i32
    return %arg0, %c0_i32, %c0_i32_0 : i32, i32, i32
  }
  func.func @transform_5(%arg0: i32, %arg1: i32) -> (i32, i32, i32) {
    %c0_i32 = arith.constant 0 : i32
    %c0_i32_0 = arith.constant 0 : i32
    return %arg0, %arg1, %c0_i32 : i32, i32, i32
  }
}

</mosaic_0001>

<llo_original>
// kernel: _forward_impl.1
$region0: #{_forward_impl.1}
  #allocation0 [shape = 'u32[]', space=smem, size = 0x4, offset = 0x4, fixed_abs, tag = 'smem constant byte address 0x4 - core index']
  #allocation1 [shape = 'u32[72,128]{1,0:T(1,128)}', space=vmem, size = 0x9000, scoped, tag = 'internal scratch']
  %s0 = inlined_call_operand.vmem [shape: bf16[2,16,32], index: 0, kind: input, shape index: {}]
  %s1 = inlined_call_operand.vmem [shape: bf16[2,32,128], index: 1, kind: input, shape index: {}]
  %s2 = inlined_call_operand.vmem [shape: f32[2,1,128], index: 2, kind: input, shape index: {}]
  %s3 = inlined_call_operand.hbm [shape: bf16[2,128,128], index: 3, kind: input, shape index: {}]
  %s4 = inlined_call_operand.vmem [shape: f32[2,1,128], index: 4, kind: input, shape index: {}]
  %s5 = inlined_call_operand.vmem [shape: bf16[2,16,128], index: 5, kind: output, shape index: {}]
  %s6 = sld [smem:[#allocation0]]
  $region57: #{_forward_impl.1} parent=0
    _
  %s8 = ssub.s32 1, %s6
  %s9 = scalar_select 0, %s8, %s6
  $region1: #{_forward_impl.1} parent=0
    #allocation2 [shape = 'u8[65536]{0}', space=vmem, size = 0x10000, scoped, tag = 'input window, operand 3']
    #allocation3 [shape = 's32[2]{0}', space=sflag, size = 0x8, scoped, tag = 'scoped memory for _forward_impl.1']
    %10 = vsyncpa [#allocation3], 0
    %s11 = scalar_lea.sflag [#allocation3], 1
    %12 = vsyncpa %s11, 0
    loop: start=0, step=1, limit=4
    $region2: #{_forward_impl.1} parent=1 // loop_pre_header
      _
    $region3: #{_forward_impl.1} parent=1 // loop_header
      %s14 = sphi 0, %s18
      %p15 = scmp.ge.s32.totalorder %s14, 4
      %s21 = sphi 0, %s33
      %s22 = sphi 0, %s29
      %s23 = sphi 0, %s21
      %s24 = sphi 0, %s22
      %s25 = sphi 0, %s23
      %s26 = sphi 0, %s24
      %s38 = sphi 0, %s40
      %s41 = sphi 0, %s38
      %s42 = sphi 0, %s41
      %s58 = sphi 0, %s42
      %s64 = sphi 0, %s66
      %s67 = sphi 0, %s64
      %s68 = sphi 0, %s67
      %s84 = sphi 0, %s68
      %s90 = sphi 0, %s92
      %s93 = sphi 0, %s90
      %s94 = sphi 0, %s93
      %s110 = sphi 0, %s94
      %s116 = sphi 0, %s118
      %s119 = sphi 0, %s116
      %s120 = sphi 0, %s119
      %s136 = sphi 0, %s120
      %s142 = sphi 0, %s144
      %s145 = sphi 0, %s142
      %s146 = sphi 0, %s145
      %s162 = sphi 0, %s146
      %s170 = sphi 0, %s172
      %s173 = sphi 0, %s170
      %s174 = sphi 0, %s173
      %s190 = sphi 0, %s174
    $region4: #{_forward_impl.1} parent=1 // loop_header_branch
      %17 = sbr.rel (%p15) target = $region8
    $region5: #{_forward_impl.1} parent=1 // loop_body
      %s19 = ssub.s32 %s14, 1
      %s20 = ssub.s32 %s14, 2
      %s27 = sadd.s32 1, %s22
      %p28 = scmp.ge.s32.totalorder %s27, 1
      %s29 = scalar_select %p28, 0, %s27
      %s30 = sadd.s32 1, %s21
      %s31 = scalar_select %p28, %s30, %s21
      %p32 = scmp.ge.s32.totalorder %s31, 2
      %s33 = scalar_select %p32, 0, %s31
      %s34 = ssub.s32 %s21, %s33
      %s35 = ssub.s32 %s22, %s29
      %s36 = sor.u32 %s34, %s35
      %p37 = scmp.eq.s32.totalorder %s36, 0
      %s39 = sadd.s32 %s38, 1
      %s40 = scalar_select %p37, %s38, %s39
      %p43 = pneg %p37
      %p44 = scmp.eq.s32.totalorder %s14, 1
      %p45 = por %p43, %p44
      %p46 = scmp.ne.s32.totalorder %s38, %s41
      %p47 = scmp.eq.s32.totalorder %s14, 0
      %p48 = por %p46, %p47
      %p49 = scmp.ne.s32.totalorder %s38, %s41
      %p50 = scmp.eq.s32.totalorder %s19, 1
      %p51 = por %p49, %p50
      %p52 = scmp.ne.s32.totalorder %s41, %s42
      %p53 = scmp.eq.s32.totalorder %s19, 0
      %p54 = por %p52, %p53
      %p55 = scmp.ne.s32.totalorder %s41, %s42
      %p56 = scmp.eq.s32.totalorder %s20, 1
      %p57 = por %p55, %p56
      %p59 = scmp.ne.s32.totalorder %s42, %s58
      %p60 = scmp.eq.s32.totalorder %s20, 0
      %p61 = por %p59, %p60
      %s62 = ssub.s32 %s21, %s33
      %p63 = scmp.eq.s32.totalorder %s62, 0
      %s65 = sadd.s32 %s64, 1
      %s66 = scalar_select %p63, %s64, %s65
      %p69 = pneg %p63
      %p70 = scmp.eq.s32.totalorder %s14, 1
      %p71 = por %p69, %p70
      %p72 = scmp.ne.s32.totalorder %s64, %s67
      %p73 = scmp.eq.s32.totalorder %s14, 0
      %p74 = por %p72, %p73
      %p75 = scmp.ne.s32.totalorder %s64, %s67
      %p76 = scmp.eq.s32.totalorder %s19, 1
      %p77 = por %p75, %p76
      %p78 = scmp.ne.s32.totalorder %s67, %s68
      %p79 = scmp.eq.s32.totalorder %s19, 0
      %p80 = por %p78, %p79
      %p81 = scmp.ne.s32.totalorder %s67, %s68
      %p82 = scmp.eq.s32.totalorder %s20, 1
      %p83 = por %p81, %p82
      %p85 = scmp.ne.s32.totalorder %s68, %s84
      %p86 = scmp.eq.s32.totalorder %s20, 0
      %p87 = por %p85, %p86
      %s88 = ssub.s32 %s21, %s33
      %p89 = scmp.eq.s32.totalorder %s88, 0
      %s91 = sadd.s32 %s90, 1
      %s92 = scalar_select %p89, %s90, %s91
      %p95 = pneg %p89
      %p96 = scmp.eq.s32.totalorder %s14, 1
      %p97 = por %p95, %p96
      %p98 = scmp.ne.s32.totalorder %s90, %s93
      %p99 = scmp.eq.s32.totalorder %s14, 0
      %p100 = por %p98, %p99
      %p101 = scmp.ne.s32.totalorder %s90, %s93
      %p102 = scmp.eq.s32.totalorder %s19, 1
      %p103 = por %p101, %p102
      %p104 = scmp.ne.s32.totalorder %s93, %s94
      %p105 = scmp.eq.s32.totalorder %s19, 0
      %p106 = por %p104, %p105
      %p107 = scmp.ne.s32.totalorder %s93, %s94
      %p108 = scmp.eq.s32.totalorder %s20, 1
      %p109 = por %p107, %p108
      %p111 = scmp.ne.s32.totalorder %s94, %s110
      %p112 = scmp.eq.s32.totalorder %s20, 0
      %p113 = por %p111, %p112
      %s114 = ssub.s32 %s21, %s33
      %p115 = scmp.eq.s32.totalorder %s114, 0
      %s117 = sadd.s32 %s116, 1
      %s118 = scalar_select %p115, %s116, %s117
      %p121 = pneg %p115
      %p122 = scmp.eq.s32.totalorder %s14, 1
      %p123 = por %p121, %p122
      %p124 = scmp.ne.s32.totalorder %s116, %s119
      %p125 = scmp.eq.s32.totalorder %s14, 0
      %p126 = por %p124, %p125
      %p127 = scmp.ne.s32.totalorder %s116, %s119
      %p128 = scmp.eq.s32.totalorder %s19, 1
      %p129 = por %p127, %p128
      %p130 = scmp.ne.s32.totalorder %s119, %s120
      %p131 = scmp.eq.s32.totalorder %s19, 0
      %p132 = por %p130, %p131
      %p133 = scmp.ne.s32.totalorder %s119, %s120
      %p134 = scmp.eq.s32.totalorder %s20, 1
      %p135 = por %p133, %p134
      %p137 = scmp.ne.s32.totalorder %s120, %s136
      %p138 = scmp.eq.s32.totalorder %s20, 0
      %p139 = por %p137, %p138
      %s140 = ssub.s32 %s21, %s33
      %p141 = scmp.eq.s32.totalorder %s140, 0
      %s143 = sadd.s32 %s142, 1
      %s144 = scalar_select %p141, %s142, %s143
      %p147 = pneg %p141
      %p148 = scmp.eq.s32.totalorder %s14, 1
      %p149 = por %p147, %p148
      %p150 = scmp.ne.s32.totalorder %s142, %s145
      %p151 = scmp.eq.s32.totalorder %s14, 0
      %p152 = por %p150, %p151
      %p153 = scmp.ne.s32.totalorder %s142, %s145
      %p154 = scmp.eq.s32.totalorder %s19, 1
      %p155 = por %p153, %p154
      %p156 = scmp.ne.s32.totalorder %s145, %s146
      %p157 = scmp.eq.s32.totalorder %s19, 0
      %p158 = por %p156, %p157
      %p159 = scmp.ne.s32.totalorder %s145, %s146
      %p160 = scmp.eq.s32.totalorder %s20, 1
      %p161 = por %p159, %p160
      %p163 = scmp.ne.s32.totalorder %s146, %s162
      %p164 = scmp.eq.s32.totalorder %s20, 0
      %p165 = por %p163, %p164
      %s166 = ssub.s32 %s21, %s33
      %s167 = ssub.s32 %s22, %s29
      %s168 = sor.u32 %s166, %s167
      %p169 = scmp.eq.s32.totalorder %s168, 0
      %s171 = sadd.s32 %s170, 1
      %s172 = scalar_select %p169, %s170, %s171
      %p175 = pneg %p169
      %p176 = scmp.eq.s32.totalorder %s14, 1
      %p177 = por %p175, %p176
      %p178 = scmp.ne.s32.totalorder %s170, %s173
      %p179 = scmp.eq.s32.totalorder %s14, 0
      %p180 = por %p178, %p179
      %p181 = scmp.ne.s32.totalorder %s170, %s173
      %p182 = scmp.eq.s32.totalorder %s19, 1
      %p183 = por %p181, %p182
      %p184 = scmp.ne.s32.totalorder %s173, %s174
      %p185 = scmp.eq.s32.totalorder %s19, 0
      %p186 = por %p184, %p185
      %p187 = scmp.ne.s32.totalorder %s173, %s174
      %p188 = scmp.eq.s32.totalorder %s20, 1
      %p189 = por %p187, %p188
      %p191 = scmp.ne.s32.totalorder %s174, %s190
      %p192 = scmp.eq.s32.totalorder %s20, 0
      %p193 = por %p191, %p192
      %p194 = scmp.le.s32.totalorder 1, %s14
      %p195 = scmp.lt.s32.totalorder %s14, 3
      %p196 = pnand %p194, %p195
      %p197 = pneg %p196
      // Predicated region
      $region9: #{_forward_impl.1} parent=5 // pred_check
        _
      $region10: #{_forward_impl.1} parent=5 // pred_check_branch
        %199 = sbr.rel (%p196) target = $region12
      $region11: #{_forward_impl.1} parent=5 // pred_region
        %s200 = ssub.s32 %s14, 1
      $region12: #{_forward_impl.1} parent=5 // pred_fallthru
        _
      %p201 = scmp.lt.s32.totalorder %s14, 2
      // Predicated region
      $region13: #{_forward_impl.1} parent=5 // pred_check
        %p202 = pneg %p201
      $region14: #{_forward_impl.1} parent=5 // pred_check_branch
        %204 = sbr.rel (%p202) target = $region16
      $region15: #{_forward_impl.1} parent=5 // pred_region
        // Predicated region
        $region17: #{_forward_impl.1} parent=15 // pred_check
          %p205 = pneg %p48
        $region18: #{_forward_impl.1} parent=15 // pred_check_branch
          %207 = sbr.rel (%p205) target = $region20
        $region19: #{_forward_impl.1} parent=15 // pred_region
          %s208 = smul.u32 2, %s22
          %p209 = scmp.lt.s32.totalorder %s21, 1
          %s210 = scalar_select %p209, %s21, 1
          %p211 = scmp.lt.s32.totalorder %s208, 1
          %s212 = scalar_select %p211, %s208, 1
          %s213 = smul.addr %s210, 2
          %s214 = sadd.s32 %s212, %s213
          %s215 = smul.addr %s214, 4
          %s216 = scalar_lea.vmem %s0, %s215
          %s217 = smul.u32 2, %s22
        $region20: #{_forward_impl.1} parent=15 // pred_fallthru
          _
        // Predicated region
        $region21: #{_forward_impl.1} parent=15 // pred_check
          %p218 = pneg %p74
        $region22: #{_forward_impl.1} parent=15 // pred_check_branch
          %220 = sbr.rel (%p218) target = $region24
        $region23: #{_forward_impl.1} parent=15 // pred_region
          %p221 = scmp.lt.s32.totalorder %s21, 1
          %s222 = scalar_select %p221, %s21, 1
          %s223 = smul.addr %s222, 4
          %s224 = smul.addr %s223, 4
          %s225 = scalar_lea.vmem %s1, %s224
        $region24: #{_forward_impl.1} parent=15 // pred_fallthru
          _
        // Predicated region
        $region25: #{_forward_impl.1} parent=15 // pred_check
          %p226 = pneg %p100
        $region26: #{_forward_impl.1} parent=15 // pred_check_branch
          %228 = sbr.rel (%p226) target = $region28
        $region27: #{_forward_impl.1} parent=15 // pred_region
          %p229 = scmp.lt.s32.totalorder %s21, 1
          %s230 = scalar_select %p229, %s21, 1
          %s231 = scalar_lea.vmem %s2, %s230
        $region28: #{_forward_impl.1} parent=15 // pred_fallthru
          _
        // Predicated region
        $region29: #{_forward_impl.1} parent=15 // pred_check
          %p232 = pneg %p126
        $region30: #{_forward_impl.1} parent=15 // pred_check_branch
          %234 = sbr.rel (%p232) target = $region32
        $region31: #{_forward_impl.1} parent=15 // pred_region
          %s235 = sand.u32 %s116, 1
          %s236 = scalar_lea.sflag [#allocation3], %s235
          %s237 = sand.u32 %s116, 1
          %s238 = smul.addr %s237, 64
          %s239 = scalar_lea.vmem [#allocation2], %s238
          %241 = vsyncadd %s236, 0
          %s242 = smul.addr %s21, 16
          %s243 = smul.addr %s242, 4
          %s244 = scalar_lea.hbm %s3, %s243
          %s245 = sshll.u32 %s244, 4
          %s246 = int_to_ptr.hbm [resolvable:$true] %s245
          %s247 = sshll.u32 %s239, 4
          %s248 = int_to_ptr.vmem [resolvable:$true] %s247
          %253 = dma.hbm_to_vmem [thread:$0]  %s246, 1024, %s248, %s236, 64, 64, 4
        $region32: #{_forward_impl.1} parent=15 // pred_fallthru
          _
        // Predicated region
        $region33: #{_forward_impl.1} parent=15 // pred_check
          %p254 = pneg %p152
        $region34: #{_forward_impl.1} parent=15 // pred_check_branch
          %256 = sbr.rel (%p254) target = $region36
        $region35: #{_forward_impl.1} parent=15 // pred_region
          %p257 = scmp.lt.s32.totalorder %s21, 1
          %s258 = scalar_select %p257, %s21, 1
          %s259 = scalar_lea.vmem %s4, %s258
        $region36: #{_forward_impl.1} parent=15 // pred_fallthru
          _
      $region16: #{_forward_impl.1} parent=5 // pred_fallthru
        _
      %p260 = scmp.le.s32.totalorder 1, %s14
      %p261 = scmp.lt.s32.totalorder %s14, 3
      %p262 = pnand %p260, %p261
      %p263 = pneg %p262
      // Predicated region
      $region37: #{_forward_impl.1} parent=5 // pred_check
        _
      $region38: #{_forward_impl.1} parent=5 // pred_check_branch
        %265 = sbr.rel (%p262) target = $region40
      $region39: #{_forward_impl.1} parent=5 // pred_region
        %s266 = ssub.s32 %s14, 1
        %s267 = sand.u32 %s119, 1
        %s268 = scalar_lea.sflag [#allocation3], %s267
        %s269 = sand.u32 %s119, 1
        %s270 = smul.addr %s269, 64
        %s271 = scalar_lea.vmem [#allocation2], %s270
        // Predicated region
        $region41: #{_forward_impl.1} parent=39 // pred_check
          %p272 = pneg %p132
        $region42: #{_forward_impl.1} parent=39 // pred_check_branch
          %274 = sbr.rel (%p272) target = $region44
        $region43: #{_forward_impl.1} parent=39 // pred_region
          %276 = dma.done %s268, 1024
        $region44: #{_forward_impl.1} parent=39 // pred_fallthru
          _
        %s277 = smul.u32 2, %s24
        %p278 = scmp.lt.s32.totalorder %s23, 1
        %s279 = scalar_select %p278, %s23, 1
        %p280 = scmp.lt.s32.totalorder %s277, 1
        %s281 = scalar_select %p280, %s277, 1
        %s282 = smul.addr %s279, 2
        %s283 = sadd.s32 %s281, %s282
        %s284 = smul.addr %s283, 4
        %s285 = scalar_lea.vmem %s0, %s284
        %p286 = pneg %p54
        %p287 = pneg %p51
        %p288 = scmp.lt.s32.totalorder %s23, 1
        %s289 = scalar_select %p288, %s23, 1
        %s290 = smul.addr %s289, 4
        %s291 = smul.addr %s290, 4
        %s292 = scalar_lea.vmem %s1, %s291
        %p293 = pneg %p80
        %p294 = pneg %p77
        %p295 = scmp.lt.s32.totalorder %s23, 1
        %s296 = scalar_select %p295, %s23, 1
        %s297 = scalar_lea.vmem %s2, %s296
        %p298 = pneg %p106
        %p299 = pneg %p103
        %s300 = sand.u32 %s119, 1
        %s301 = scalar_lea.sflag [#allocation3], %s300
        %s302 = sand.u32 %s119, 1
        %s303 = smul.addr %s302, 64
        %s304 = scalar_lea.vmem [#allocation2], %s303
        %p305 = pneg %p132
        %p306 = pneg %p129
        %p307 = scmp.lt.s32.totalorder %s23, 1
        %s308 = scalar_select %p307, %s23, 1
        %s309 = scalar_lea.vmem %s4, %s308
        %p310 = pneg %p158
        %p311 = pneg %p155
        %p312 = pneg %p186
        %p313 = pneg %p183
        %s314 = smul.u32 2, %s24
        %p315 = scmp.lt.s32.totalorder %s23, 1
        %s316 = scalar_select %p315, %s23, 1
        %p317 = scmp.lt.s32.totalorder %s314, 1
        %s318 = scalar_select %p317, %s314, 1
        %s319 = smul.addr %s316, 2
        %s320 = sadd.s32 %s318, %s319
        %s321 = smul.addr %s320, 4
        %s322 = scalar_lea.vmem %s5, %s321
        %s323 = smul.u32 2, %s24
        %p324 = scmp.lt.s32.totalorder %s23, 1
        %s325 = scalar_select %p324, %s23, 1
        %p326 = scmp.lt.s32.totalorder %s323, 1
        %s327 = scalar_select %p326, %s323, 1
        %s328 = smul.addr %s325, 2
        %s329 = sadd.s32 %s327, %s328
        %s330 = smul.addr %s329, 4
        %s331 = scalar_lea.vmem %s0, %s330
        %s332 = smul.u32 2, %s24
        %p333 = scmp.lt.s32.totalorder %s23, 1
        %s334 = scalar_select %p333, %s23, 1
        %s335 = smul.addr %s334, 4
        %s336 = smul.addr %s335, 4
        %s337 = scalar_lea.vmem %s1, %s336
        %p338 = scmp.lt.s32.totalorder %s23, 1
        %s339 = scalar_select %p338, %s23, 1
        %s340 = scalar_lea.vmem %s2, %s339
        %p341 = scmp.lt.s32.totalorder %s23, 1
        %s342 = scalar_select %p341, %s23, 1
        %s343 = scalar_lea.vmem %s4, %s342
        %s344 = smul.u32 2, %s24
        %p345 = scmp.lt.s32.totalorder %s23, 1
        %s346 = scalar_select %p345, %s23, 1
        %p347 = scmp.lt.s32.totalorder %s344, 1
        %s348 = scalar_select %p347, %s344, 1
        %s349 = smul.addr %s346, 2
        %s350 = sadd.s32 %s348, %s349
        %s351 = smul.addr %s350, 4
        %s352 = scalar_lea.vmem %s5, %s351
        %s353 = smul.u32 2, %s24
        %v355 = vld [vmem:[%s331] sm:$0xf]
        %v356 = vld [vmem:[%s331 + $0x4] sm:$0xf]
        %v357 = vld [vmem:[%s337] sm:$0xf]
        %v358 = vld [vmem:[%s337 + $0x4] sm:$0xf]
        %v359 = vld [vmem:[%s337 + $0x8] sm:$0xf]
        %v360 = vld [vmem:[%s337 + $0xc] sm:$0xf]
        %v361 = vld [vmem:[%s340] sm:$0x1]
        %v363 = vperm.slane %v361, 0
        %v367 = vunpack.c.l.b16 %v355
        %v368 = vunpack.c.l.b16 %v356
        %v369 = vpack.c.b16 %v368, %v367
        %v374 = vunpack.c.l.b16 %v357
        %v375 = vunpack.c.l.b16 %v358
        %v376 = vunpack.c.l.b16 %v359
        %v377 = vunpack.c.l.b16 %v360
        %v378 = vpack.c.b16 %v375, %v374
        %v379 = vpack.c.b16 %v377, %v376
        %vm382 = vcmask 261120
        %v384 = vsel %vm382, %v369, 0
        %386 = vmatpush.bf16.msra.mxu0 0
        %387 = vmatpush.bf16.msra.mxu0 0
        %388 = vmatpush.bf16.msra.mxu0 0
        %389 = vmatpush.bf16.msra.mxu0 0
        %390 = vmatpush.bf16.msra.mxu0 0
        %391 = vmatpush.bf16.msra.mxu0 0
        %392 = vmatpush.bf16.msra.mxu0 %v379
        %393 = vmatpush.bf16.msra.mxu0 %v378
        %394 = vmatmul.bf16.gmra.mxu0 %v384
        %v395 = vpop.f32.mrf.mxu0
        %v396 = vadd.f32 %v363, %v395
        %v397 = vpop.f32.mrf.mxu0
        %v398 = vadd.f32 %v363, %v397
        %399 = vdwg.mxu0
        %v400 = vmax.f32 %v396, 0.0
        %v401 = vmax.f32 %v398, 0.0
        %v402 = vpack.c.bf16 %v401, %v400
        %v403 = vld [vmem:[%s271] sm:$0xf]
        %v404 = vld [vmem:[%s271 + $0x4] sm:$0xf]
        %v405 = vld [vmem:[%s271 + $0x8] sm:$0xf]
        %v406 = vld [vmem:[%s271 + $0xc] sm:$0xf]
        %v407 = vld [vmem:[%s271 + $0x10] sm:$0xf]
        %v408 = vld [vmem:[%s271 + $0x14] sm:$0xf]
        %v409 = vld [vmem:[%s271 + $0x18] sm:$0xf]
        %v410 = vld [vmem:[%s271 + $0x1c] sm:$0xf]
        %v411 = vld [vmem:[%s271 + $0x20] sm:$0xf]
        %v412 = vld [vmem:[%s271 + $0x24] sm:$0xf]
        %v413 = vld [vmem:[%s271 + $0x28] sm:$0xf]
        %v414 = vld [vmem:[%s271 + $0x2c] sm:$0xf]
        %v415 = vld [vmem:[%s271 + $0x30] sm:$0xf]
        %v416 = vld [vmem:[%s271 + $0x34] sm:$0xf]
        %v417 = vld [vmem:[%s271 + $0x38] sm:$0xf]
        %v418 = vld [vmem:[%s271 + $0x3c] sm:$0xf]
        %v419 = vld [vmem:[%s343] sm:$0x1]
        %v421 = vperm.slane %v419, 0
        %v439 = vunpack.c.l.b16 %v403
        %v440 = vunpack.c.l.b16 %v404
        %v441 = vunpack.c.l.b16 %v405
        %v442 = vunpack.c.l.b16 %v406
        %v443 = vunpack.c.l.b16 %v407
        %v444 = vunpack.c.l.b16 %v408
        %v445 = vunpack.c.l.b16 %v409
        %v446 = vunpack.c.l.b16 %v410
        %v447 = vunpack.c.l.b16 %v411
        %v448 = vunpack.c.l.b16 %v412
        %v449 = vunpack.c.l.b16 %v413
        %v450 = vunpack.c.l.b16 %v414
        %v451 = vunpack.c.l.b16 %v415
        %v452 = vunpack.c.l.b16 %v416
        %v453 = vunpack.c.l.b16 %v417
        %v454 = vunpack.c.l.b16 %v418
        %v455 = vpack.c.b16 %v440, %v439
        %v456 = vpack.c.b16 %v442, %v441
        %v457 = vpack.c.b16 %v444, %v443
        %v458 = vpack.c.b16 %v446, %v445
        %v459 = vpack.c.b16 %v448, %v447
        %v460 = vpack.c.b16 %v450, %v449
        %v461 = vpack.c.b16 %v452, %v451
        %v462 = vpack.c.b16 %v454, %v453
        %471 = vmatpush.bf16.msra.mxu0 %v462
        %472 = vmatpush.bf16.msra.mxu0 %v461
        %473 = vmatpush.bf16.msra.mxu0 %v460
        %474 = vmatpush.bf16.msra.mxu0 %v459
        %475 = vmatpush.bf16.msra.mxu0 %v458
        %476 = vmatpush.bf16.msra.mxu0 %v457
        %477 = vmatpush.bf16.msra.mxu0 %v456
        %478 = vmatpush.bf16.msra.mxu0 %v455
        %479 = vmatmul.bf16.gmra.mxu0 %v402
        %v480 = vpop.f32.mrf.mxu0
        %v481 = vadd.f32 %v421, %v480
        %v482 = vpop.f32.mrf.mxu0
        %v483 = vadd.f32 %v421, %v482
        %484 = vdwg.mxu0
        %v485 = vpack.c.bf16 %v481, %v481
        %v486 = vpack.c.bf16 %v483, %v483
        %487 = vst [vmem:[%s352] sm:$0xf] %v485
        %488 = vst [vmem:[%s352 + $0x4] sm:$0xf] %v486
        %s489 = smul.u32 2, %s24
        %p490 = scmp.lt.s32.totalorder %s23, 1
        %s491 = scalar_select %p490, %s23, 1
        %p492 = scmp.lt.s32.totalorder %s489, 1
        %s493 = scalar_select %p492, %s489, 1
        %s494 = smul.addr %s491, 2
        %s495 = sadd.s32 %s493, %s494
        %s496 = smul.addr %s495, 4
        %s497 = scalar_lea.vmem %s5, %s496
        // Predicated region
        $region45: #{_forward_impl.1} parent=39 // pred_check
          %p498 = pneg %p183
        $region46: #{_forward_impl.1} parent=39 // pred_check_branch
          %500 = sbr.rel (%p498) target = $region48
        $region47: #{_forward_impl.1} parent=39 // pred_region
          %s501 = smul.u32 2, %s24
        $region48: #{_forward_impl.1} parent=39 // pred_fallthru
          _
      $region40: #{_forward_impl.1} parent=5 // pred_fallthru
        _
      %p502 = scmp.le.s32.totalorder 2, %s14
      // Predicated region
      $region49: #{_forward_impl.1} parent=5 // pred_check
        %p503 = pneg %p502
      $region50: #{_forward_impl.1} parent=5 // pred_check_branch
        %505 = sbr.rel (%p503) target = $region52
      $region51: #{_forward_impl.1} parent=5 // pred_region
        %s506 = ssub.s32 %s14, 2
        // Predicated region
        $region53: #{_forward_impl.1} parent=51 // pred_check
          %p507 = pneg %p189
        $region54: #{_forward_impl.1} parent=51 // pred_check_branch
          %509 = sbr.rel (%p507) target = $region56
        $region55: #{_forward_impl.1} parent=51 // pred_region
          %s510 = smul.u32 2, %s26
          %p511 = scmp.lt.s32.totalorder %s25, 1
          %s512 = scalar_select %p511, %s25, 1
          %p513 = scmp.lt.s32.totalorder %s510, 1
          %s514 = scalar_select %p513, %s510, 1
          %s515 = smul.addr %s512, 2
          %s516 = sadd.s32 %s514, %s515
          %s517 = smul.addr %s516, 4
          %s518 = scalar_lea.vmem %s5, %s517
        $region56: #{_forward_impl.1} parent=51 // pred_fallthru
          _
      $region52: #{_forward_impl.1} parent=5 // pred_fallthru
        _
    $region6: #{_forward_impl.1} parent=1 // loop_footer
      %s18 = sadd.s32 1, %s14
    $region7: #{_forward_impl.1} parent=1 // loop_footer_branch
      %13 = sbr.rel target = $region3
    $region8: #{_forward_impl.1} parent=1 // loop_exit
      _
    %519 = vsyncpa [#allocation3], 1
    %s520 = scalar_lea.sflag [#allocation3], 1
    %521 = vsyncpa %s520, 1

</llo_original>
